<compile_context>
chip_gen: v7x
topology: tpu7x:2x2x1
jax: 0.10.0
libtpu: 0.0.40
codegen_flags: <defaults>
</compile_context>

<pallas_src>
import functools
import math

import jax
import jax.numpy as jnp
from jax import lax
from jax.experimental import pallas as pl
from jax.experimental.pallas import tpu as pltpu


def _round_up(x, m):
    return ((x + m - 1) // m) * m


def lora_linear_kernel(x_ref, w_ref, b_ref, a_ref, bmat_ref, o_ref,
                       acc_ref, xa_ref, *, scale):
    j = pl.program_id(1)
    k = pl.program_id(2)
    nk = pl.num_programs(2)

    # --- init accumulators --------------------------------------------------
    @pl.when(k == 0)
    def _():
        acc_ref[...] = jnp.zeros_like(acc_ref)

    @pl.when(jnp.logical_and(j == 0, k == 0))
    def _():
        xa_ref[...] = jnp.zeros_like(xa_ref)

    x = x_ref[...]                                   # (tm, tk)

    # --- base path: x @ W^T, W tile is in native (tn, tk) layout ------------
    acc_ref[...] += lax.dot_general(
        x, w_ref[...],
        dimension_numbers=(((1,), (1,)), ((), ())),  # contract K with K
        preferred_element_type=jnp.float32)

    # --- LoRA first matmul: accumulate xa = x @ A once per M-tile -----------
    @pl.when(j == 0)
    def _():
        xa_ref[...] += jnp.dot(x, a_ref[...],
                               preferred_element_type=jnp.float32)

    # --- finalize: bias + (xa * scale) @ B, single lane-dense store ---------
    @pl.when(k == nk - 1)
    def _():
        lora = jnp.dot(xa_ref[...] * scale, bmat_ref[...],
                       preferred_element_type=jnp.float32)     # (tm, tn)
        o_ref[...] = (acc_ref[...] + b_ref[...] + lora).astype(o_ref.dtype)


def lora_linear(x, weight, bias, lora_A, lora_B, alpha=32, rank=4,
                compute_dtype=None):
    """LoRALinear forward.

    x: (M, K); weight: (N, K) (native PyTorch Linear layout); bias: (N,);
    lora_A: (K, rank); lora_B: (rank, N).
    compute_dtype: optionally cast x/weight/A/B (e.g. jnp.bfloat16 on v6e/v7x);
    accumulation stays f32 either way.
    """
    M, K = x.shape
    N, K2 = weight.shape
    assert K == K2 and lora_A.shape == (K, rank) and lora_B.shape == (rank, N)

    scaling = float(alpha) / float(rank)
    out_dtype = x.dtype

    if compute_dtype is not None:
        x = x.astype(compute_dtype)
        weight = weight.astype(compute_dtype)
        lora_A = lora_A.astype(compute_dtype)
        lora_B = lora_B.astype(compute_dtype)

    # Tile sizes: lane axis a multiple of 128, sublane axis a multiple of 8.
    # These fit comfortably inside the default scoped VMEM on v5e/v6e/v7x
    # (~6 MiB peak with double-buffering), so no vmem_limit_bytes bump needed.
    tm = min(256, _round_up(M, 8))
    tn = min(512, _round_up(N, 128))
    tk = min(512, _round_up(K, 128))
    r_pad = max(128, _round_up(rank, 128))

    M_pad = _round_up(M, tm)
    N_pad = _round_up(N, tn)
    K_pad = _round_up(K, tk)

    # Zero-pad to tile multiples (no-op when already aligned).
    x_p = jnp.pad(x, ((0, M_pad - M), (0, K_pad - K)))
    w_p = jnp.pad(weight, ((0, N_pad - N), (0, K_pad - K)))           # (N_pad, K_pad)
    b_p = jnp.pad(bias.astype(jnp.float32), (0, N_pad - N)).reshape(1, N_pad)
    a_p = jnp.pad(lora_A, ((0, K_pad - K), (0, r_pad - rank)))        # (K_pad, r_pad)
    bm_p = jnp.pad(lora_B, ((0, r_pad - rank), (0, N_pad - N)))       # (r_pad, N_pad)

    grid = (M_pad // tm, N_pad // tn, K_pad // tk)

    cost = pl.CostEstimate(
        flops=2 * M * N * K + 2 * M * K * rank + 2 * M * rank * N,
        transcendentals=0,
        bytes_accessed=(x_p.size * x_p.dtype.itemsize
                        + w_p.size * w_p.dtype.itemsize
                        + b_p.size * b_p.dtype.itemsize
                        + a_p.size * a_p.dtype.itemsize
                        + bm_p.size * bm_p.dtype.itemsize
                        + M_pad * N_pad * jnp.dtype(out_dtype).itemsize),
    )

    out = pl.pallas_call(
        functools.partial(lora_linear_kernel, scale=scaling),
        out_shape=jax.ShapeDtypeStruct((M_pad, N_pad), out_dtype),
        grid_spec=pltpu.PrefetchScalarGridSpec(
            num_scalar_prefetch=0,
            grid=grid,
            in_specs=[
                pl.BlockSpec((tm, tk), lambda i, j, k: (i, k)),     # x
                pl.BlockSpec((tn, tk), lambda i, j, k: (j, k)),     # W (native N,K)
                pl.BlockSpec((1, tn), lambda i, j, k: (0, j)),      # bias
                pl.BlockSpec((tk, r_pad), lambda i, j, k: (k, 0)),  # lora_A
                pl.BlockSpec((r_pad, tn), lambda i, j, k: (0, j)),  # lora_B
            ],
            out_specs=pl.BlockSpec((tm, tn), lambda i, j, k: (i, j)),
            scratch_shapes=[
                pltpu.VMEM((tm, tn), jnp.float32),      # base+lora accumulator
                pltpu.VMEM((tm, r_pad), jnp.float32),   # xa = x @ A accumulator
            ],
        ),
        compiler_params=pltpu.CompilerParams(
            # N axis must be "arbitrary": xa scratch built at j == 0 is reused
            # sequentially by the later j tiles of the same i.
            dimension_semantics=("parallel", "arbitrary", "arbitrary")),
        cost_estimate=cost,
    )(x_p, w_p, b_p, a_p, bm_p)

    return out[:M, :N]


if __name__ == "__main__":
    key = jax.random.PRNGKey(0)
    k_x, k_w, k_b, k_a = jax.random.split(key, 4)

    batch, in_features, out_features, rank, alpha = 8, 32, 64, 4, 32

    x = jax.random.normal(k_x, (batch, in_features), dtype=jnp.float32)

    # Frozen nn.Linear params (deterministic synthetic init).
    weight = jax.random.normal(k_w, (out_features, in_features),
                               dtype=jnp.float32) * 0.05
    bias = jax.random.normal(k_b, (out_features,), dtype=jnp.float32) * 0.01

    # LoRA params: A ~ kaiming_uniform(a=sqrt(5)) equivalent bound, B = zeros
    # (matches reset_parameters: bound = 1/sqrt(fan_in)).
    bound = 1.0 / math.sqrt(in_features)
    lora_A = jax.random.uniform(k_a, (in_features, rank), dtype=jnp.float32,
                                minval=-bound, maxval=bound)
    lora_B = jnp.zeros((rank, out_features), dtype=jnp.float32)
    # With B == 0 the LoRA path is exactly zero (fresh init); perturb so the
    # LoRA matmuls are actually exercised by the test.
    lora_B = lora_B + 0.01

    out = lora_linear(x, weight, bias, lora_A, lora_B, alpha=alpha, rank=rank)
    out = jax.block_until_ready(out)

    # Pure-JAX reference check (f32 path -> tight tolerance).
    ref = x @ weight.T + bias + (x @ lora_A @ lora_B) * (alpha / rank)
    assert out.shape == ref.shape, "shape mismatch vs reference"
    assert jnp.allclose(out, ref, atol=1e-5, rtol=1e-5), "mismatch vs reference"

    print("KERNEL_OK")
</pallas_src>

<mosaic_0001>
module attributes {stable_mosaic.version = 11 : i64} {
  func.func @lora_linear_kernel(%arg0: i32, %arg1: i32, %arg2: i32, %arg3: memref<8x128xf32, #tpu.memory_space<vmem>>, %arg4: memref<128x128xf32, #tpu.memory_space<vmem>>, %arg5: memref<1x128xf32, #tpu.memory_space<vmem>>, %arg6: memref<128x128xf32, #tpu.memory_space<vmem>>, %arg7: memref<128x128xf32, #tpu.memory_space<vmem>>, %arg8: memref<8x128xf32, #tpu.memory_space<vmem>>, %arg9: memref<8x128xf32, #tpu.memory_space<vmem>>, %arg10: memref<8x128xf32, #tpu.memory_space<vmem>>) attributes {dimension_semantics = [#tpu.dimension_semantics<parallel>, #tpu.dimension_semantics<arbitrary>, #tpu.dimension_semantics<arbitrary>], iteration_bounds = array<i64: 1, 1, 1>, scalar_prefetch = 0 : i64, scratch_operands = 2 : i64, tpu.core_type = #tpu.core_type<tc>, window_params = [{transform_indices = @transform_0, window_bounds = array<i64: 8, 128>}, {transform_indices = @transform_1, window_bounds = array<i64: 128, 128>}, {transform_indices = @transform_2, window_bounds = array<i64: 1, 128>}, {transform_indices = @transform_3, window_bounds = array<i64: 128, 128>}, {transform_indices = @transform_4, window_bounds = array<i64: 128, 128>}, {transform_indices = @transform_5, window_bounds = array<i64: 8, 128>}]} {
    %c0_i32 = arith.constant 0 : i32
    %0 = arith.cmpi eq, %arg2, %c0_i32 : i32
    %1 = arith.extui %0 : i1 to i32
    %c0_i32_0 = arith.constant 0 : i32
    %2 = arith.cmpi ne, %1, %c0_i32_0 : i32
    scf.if %2 {
      %cst_15 = arith.constant 0.000000e+00 : f32
      %20 = vector.broadcast %cst_15 : f32 to vector<8x128xf32>
      %c0_16 = arith.constant 0 : index
      %c0_17 = arith.constant 0 : index
      %21 = vector.load %arg9[%c0_16, %c0_17] : memref<8x128xf32, #tpu.memory_space<vmem>>, vector<8x128xf32>
      tpu.vector_store %arg9[%c0_16, %c0_17], %20 {strides = array<i32>} : memref<8x128xf32, #tpu.memory_space<vmem>>, vector<8x128xf32>,
    } else {
    }
    %c0_i32_1 = arith.constant 0 : i32
    %3 = arith.cmpi eq, %arg1, %c0_i32_1 : i32
    %c0_i32_2 = arith.constant 0 : i32
    %4 = arith.cmpi eq, %arg2, %c0_i32_2 : i32
    %5 = arith.andi %3, %4 : i1
    %6 = arith.extui %5 : i1 to i32
    %c0_i32_3 = arith.constant 0 : i32
    %7 = arith.cmpi ne, %6, %c0_i32_3 : i32
    scf.if %7 {
      %cst_15 = arith.constant 0.000000e+00 : f32
      %20 = vector.broadcast %cst_15 : f32 to vector<8x128xf32>
      %c0_16 = arith.constant 0 : index
      %c0_17 = arith.constant 0 : index
      %21 = vector.load %arg10[%c0_16, %c0_17] : memref<8x128xf32, #tpu.memory_space<vmem>>, vector<8x128xf32>
      tpu.vector_store %arg10[%c0_16, %c0_17], %20 {strides = array<i32>} : memref<8x128xf32, #tpu.memory_space<vmem>>, vector<8x128xf32>,
    } else {
    }
    %c0 = arith.constant 0 : index
    %c0_4 = arith.constant 0 : index
    %8 = vector.load %arg3[%c0, %c0_4] : memref<8x128xf32, #tpu.memory_space<vmem>>, vector<8x128xf32>
    %c0_5 = arith.constant 0 : index
    %c0_6 = arith.constant 0 : index
    %9 = vector.load %arg9[%c0_5, %c0_6] : memref<8x128xf32, #tpu.memory_space<vmem>>, vector<8x128xf32>
    %c0_7 = arith.constant 0 : index
    %c0_8 = arith.constant 0 : index
    %10 = vector.load %arg4[%c0_7, %c0_8] : memref<128x128xf32, #tpu.memory_space<vmem>>, vector<128x128xf32>
    %cst = arith.constant dense<0.000000e+00> : vector<8x128xf32>
    %11 = tpu.matmul %8, %10, %cst {dimension_numbers = #tpu.dot_dimension_numbers<[1], [1], [0], [0], [0, 0, 1, 0], [], []>} : vector<8x128xf32>, vector<128x128xf32>, vector<8x128xf32> -> vector<8x128xf32>
    %12 = arith.addf %9, %11 : vector<8x128xf32>
    %c0_9 = arith.constant 0 : index
    %c0_10 = arith.constant 0 : index
    %13 = vector.load %arg9[%c0_9, %c0_10] : memref<8x128xf32, #tpu.memory_space<vmem>>, vector<8x128xf32>
    tpu.vector_store %arg9[%c0_9, %c0_10], %12 {strides = array<i32>} : memref<8x128xf32, #tpu.memory_space<vmem>>, vector<8x128xf32>,
    %c0_i32_11 = arith.constant 0 : i32
    %14 = arith.cmpi eq, %arg1, %c0_i32_11 : i32
    %15 = arith.extui %14 : i1 to i32
    %c0_i32_12 = arith.constant 0 : i32
    %16 = arith.cmpi ne, %15, %c0_i32_12 : i32
    scf.if %16 {
      %c0_15 = arith.constant 0 : index
      %c0_16 = arith.constant 0 : index
      %20 = vector.load %arg10[%c0_15, %c0_16] : memref<8x128xf32, #tpu.memory_space<vmem>>, vector<8x128xf32>
      %c0_17 = arith.constant 0 : index
      %c0_18 = arith.constant 0 : index
      %21 = vector.load %arg6[%c0_17, %c0_18] : memref<128x128xf32, #tpu.memory_space<vmem>>, vector<128x128xf32>
      %cst_19 = arith.constant dense<0.000000e+00> : vector<8x128xf32>
      %22 = tpu.matmul %8, %21, %cst_19 {dimension_numbers = #tpu.dot_dimension_numbers<[1], [0], [0], [1], [0, 0, 1, 1], [], []>} : vector<8x128xf32>, vector<128x128xf32>, vector<8x128xf32> -> vector<8x128xf32>
      %23 = arith.addf %20, %22 : vector<8x128xf32>
      %c0_20 = arith.constant 0 : index
      %c0_21 = arith.constant 0 : index
      %24 = vector.load %arg10[%c0_20, %c0_21] : memref<8x128xf32, #tpu.memory_space<vmem>>, vector<8x128xf32>
      tpu.vector_store %arg10[%c0_20, %c0_21], %23 {strides = array<i32>} : memref<8x128xf32, #tpu.memory_space<vmem>>, vector<8x128xf32>,
    } else {
    }
    %c0_i32_13 = arith.constant 0 : i32
    %17 = arith.cmpi eq, %arg2, %c0_i32_13 : i32
    %18 = arith.extui %17 : i1 to i32
    %c0_i32_14 = arith.constant 0 : i32
    %19 = arith.cmpi ne, %18, %c0_i32_14 : i32
    scf.if %19 {
      %c0_15 = arith.constant 0 : index
      %c0_16 = arith.constant 0 : index
      %20 = vector.load %arg10[%c0_15, %c0_16] : memref<8x128xf32, #tpu.memory_space<vmem>>, vector<8x128xf32>
      %cst_17 = arith.constant 8.000000e+00 : f32
      %21 = vector.broadcast %cst_17 : f32 to vector<8x128xf32>
      %22 = arith.mulf %20, %21 : vector<8x128xf32>
      %c0_18 = arith.constant 0 : index
      %c0_19 = arith.constant 0 : index
      %23 = vector.load %arg7[%c0_18, %c0_19] : memref<128x128xf32, #tpu.memory_space<vmem>>, vector<128x128xf32>
      %cst_20 = arith.constant dense<0.000000e+00> : vector<8x128xf32>
      %24 = tpu.matmul %22, %23, %cst_20 {dimension_numbers = #tpu.dot_dimension_numbers<[1], [0], [0], [1], [0, 0, 1, 1], [], []>} : vector<8x128xf32>, vector<128x128xf32>, vector<8x128xf32> -> vector<8x128xf32>
      %c0_21 = arith.constant 0 : index
      %c0_22 = arith.constant 0 : index
      %25 = vector.load %arg9[%c0_21, %c0_22] : memref<8x128xf32, #tpu.memory_space<vmem>>, vector<8x128xf32>
      %c0_23 = arith.constant 0 : index
      %c0_24 = arith.constant 0 : index
      %26 = vector.load %arg5[%c0_23, %c0_24] : memref<1x128xf32, #tpu.memory_space<vmem>>, vector<1x128xf32>
      %27 = vector.broadcast %26 : vector<1x128xf32> to vector<8x128xf32>
      %28 = arith.addf %25, %27 : vector<8x128xf32>
      %29 = arith.addf %28, %24 : vector<8x128xf32>
      %c0_25 = arith.constant 0 : index
      %c0_26 = arith.constant 0 : index
      %30 = vector.load %arg8[%c0_25, %c0_26] : memref<8x128xf32, #tpu.memory_space<vmem>>, vector<8x128xf32>
      tpu.vector_store %arg8[%c0_25, %c0_26], %29 {strides = array<i32>} : memref<8x128xf32, #tpu.memory_space<vmem>>, vector<8x128xf32>,
    } else {
    }
    return
  }
  func.func @transform_0(%arg0: i32, %arg1: i32, %arg2: i32) -> (i32, i32) {
    %c0_i32 = arith.constant 0 : i32
    return %arg0, %arg2 : i32, i32
  }
  func.func @transform_1(%arg0: i32, %arg1: i32, %arg2: i32) -> (i32, i32) {
    %c0_i32 = arith.constant 0 : i32
    return %arg1, %arg2 : i32, i32
  }
  func.func @transform_2(%arg0: i32, %arg1: i32, %arg2: i32) -> (i32, i32) {
    %c0_i32 = arith.constant 0 : i32
    %c0_i32_0 = arith.constant 0 : i32
    return %c0_i32, %arg1 : i32, i32
  }
  func.func @transform_3(%arg0: i32, %arg1: i32, %arg2: i32) -> (i32, i32) {
    %c0_i32 = arith.constant 0 : i32
    %c0_i32_0 = arith.constant 0 : i32
    return %arg2, %c0_i32 : i32, i32
  }
  func.func @transform_4(%arg0: i32, %arg1: i32, %arg2: i32) -> (i32, i32) {
    %c0_i32 = arith.constant 0 : i32
    %c0_i32_0 = arith.constant 0 : i32
    return %c0_i32, %arg1 : i32, i32
  }
  func.func @transform_5(%arg0: i32, %arg1: i32, %arg2: i32) -> (i32, i32) {
    %c0_i32 = arith.constant 0 : i32
    return %arg0, %arg1 : i32, i32
  }
}

</mosaic_0001>

<llo_original>
// kernel: tpu_custom_call.1
$region0: #{tpu_custom_call.1}
  #allocation0 [shape = 'u32[]', space=smem, size = 0x4, offset = 0x4, fixed_abs, tag = 'smem constant byte address 0x4 - core index']
  #allocation1 [shape = 'u32[144,128]{1,0:T(1,128)}', space=vmem, size = 0x12000, scoped, tag = 'internal scratch']
  #allocation2 [shape = 'f32[8,128]{1,0:T(8,128)}', space=vmem, size = 0x1000, scoped, tag = 'scratch operand']
  #allocation3 [shape = 'f32[8,128]{1,0:T(8,128)}', space=vmem, size = 0x1000, scoped, tag = 'scratch operand']
  %s0 = inlined_call_operand.hbm [shape: f32[8,128], index: 0, kind: input, shape index: {}]
  %s1 = inlined_call_operand.hbm [shape: f32[128,128], index: 1, kind: input, shape index: {}]
  %s2 = inlined_call_operand.vmem [shape: f32[1,128], index: 2, kind: input, shape index: {}]
  %s3 = inlined_call_operand.hbm [shape: f32[128,128], index: 3, kind: input, shape index: {}]
  %s4 = inlined_call_operand.hbm [shape: f32[128,128], index: 4, kind: input, shape index: {}]
  %s5 = inlined_call_operand.hbm [shape: f32[8,128], index: 5, kind: output, shape index: {}]
  %s6 = sld [smem:[#allocation0]]
  $region62: #{tpu_custom_call.1} parent=0
    _
  %s8 = ssub.s32 1, %s6
  %s9 = scalar_select 0, %s8, %s6
  $region1: #{tpu_custom_call.1} parent=0
    #allocation4 [shape = 'u8[4096]{0}', space=vmem, size = 0x1000, scoped, tag = 'input window, operand 0, single buffered']
    #allocation5 [shape = 's32[1]{0}', space=sflag, size = 0x4, scoped, tag = 'scoped memory for tpu_custom_call.1']
    #allocation6 [shape = 's32[1]{0}', space=sflag, size = 0x4, scoped, tag = 'scoped memory for tpu_custom_call.1']
    #allocation7 [shape = 'u8[65536]{0}', space=vmem, size = 0x10000, scoped, tag = 'input window, operand 1, single buffered']
    #allocation8 [shape = 's32[1]{0}', space=sflag, size = 0x4, scoped, tag = 'scoped memory for tpu_custom_call.1']
    #allocation9 [shape = 'u8[65536]{0}', space=vmem, size = 0x10000, scoped, tag = 'input window, operand 3, single buffered']
    #allocation10 [shape = 'u8[65536]{0}', space=vmem, size = 0x10000, scoped, tag = 'input window, operand 4, single buffered']
    #allocation11 [shape = 's32[1]{0}', space=sflag, size = 0x4, scoped, tag = 'scoped memory for tpu_custom_call.1']
    #allocation12 [shape = 'u8[4096]{0}', space=vmem, size = 0x1000, scoped, tag = 'output window, operand 0, single buffered']
    %10 = vsyncpa [#allocation5], 0
    %11 = vsyncpa [#allocation8], 0
    %12 = vsyncpa [#allocation11], 0
    %13 = vsyncpa [#allocation6], 0
    // Predicated region
    $region2: #{tpu_custom_call.1} parent=1 // pred_check
      _
    $region3: #{tpu_custom_call.1} parent=1 // pred_check_branch
      %15 = sbr.rel (0) target = $region5
    $region4: #{tpu_custom_call.1} parent=1 // pred_region
      %s17 = ssub.s32 128, 128
      %18 = vsyncadd [#allocation5], %s17
      %s20 = sshll.u32 [#allocation4], 4
      %s21 = int_to_ptr.vmem [resolvable:$true] %s20
      %23 = dma.hbm_to_vmem [thread:$0]  %s0, 128, %s21, [#allocation5]
    $region5: #{tpu_custom_call.1} parent=1 // pred_fallthru
      _
    // Predicated region
    $region6: #{tpu_custom_call.1} parent=1 // pred_check
      _
    $region7: #{tpu_custom_call.1} parent=1 // pred_check_branch
      %25 = sbr.rel (0) target = $region9
    $region8: #{tpu_custom_call.1} parent=1 // pred_region
      %s27 = ssub.s32 2048, 2048
      %28 = vsyncadd [#allocation8], %s27
      %s29 = sshll.u32 [#allocation7], 4
      %s30 = int_to_ptr.vmem [resolvable:$true] %s29
      %35 = dma.hbm_to_vmem [thread:$0]  %s1, 2048, %s30, [#allocation8], 128, 128, 8
    $region9: #{tpu_custom_call.1} parent=1 // pred_fallthru
      _
    // Predicated region
    $region10: #{tpu_custom_call.1} parent=1 // pred_check
      _
    $region11: #{tpu_custom_call.1} parent=1 // pred_check_branch
      %37 = sbr.rel (0) target = $region13
    $region12: #{tpu_custom_call.1} parent=1 // pred_region
      _
    $region13: #{tpu_custom_call.1} parent=1 // pred_fallthru
      _
    // Predicated region
    $region14: #{tpu_custom_call.1} parent=1 // pred_check
      _
    $region15: #{tpu_custom_call.1} parent=1 // pred_check_branch
      %39 = sbr.rel (0) target = $region17
    $region16: #{tpu_custom_call.1} parent=1 // pred_region
      %s41 = ssub.s32 2048, 2048
      %42 = vsyncadd [#allocation8], %s41
      %s43 = sshll.u32 [#allocation9], 4
      %s44 = int_to_ptr.vmem [resolvable:$true] %s43
      %49 = dma.hbm_to_vmem [thread:$0]  %s3, 2048, %s44, [#allocation8], 128, 128, 8
    $region17: #{tpu_custom_call.1} parent=1 // pred_fallthru
      _
    // Predicated region
    $region18: #{tpu_custom_call.1} parent=1 // pred_check
      _
    $region19: #{tpu_custom_call.1} parent=1 // pred_check_branch
      %51 = sbr.rel (0) target = $region21
    $region20: #{tpu_custom_call.1} parent=1 // pred_region
      %s53 = ssub.s32 2048, 2048
      %54 = vsyncadd [#allocation11], %s53
      %s55 = sshll.u32 [#allocation10], 4
      %s56 = int_to_ptr.vmem [resolvable:$true] %s55
      %61 = dma.hbm_to_vmem [thread:$0]  %s4, 2048, %s56, [#allocation11], 128, 128, 8
    $region21: #{tpu_custom_call.1} parent=1 // pred_fallthru
      _
    // Predicated region
    $region22: #{tpu_custom_call.1} parent=1 // pred_check
      _
    $region23: #{tpu_custom_call.1} parent=1 // pred_check_branch
      %63 = sbr.rel (0) target = $region25
    $region24: #{tpu_custom_call.1} parent=1 // pred_region
      %64 = dma.done [#allocation5], 128
    $region25: #{tpu_custom_call.1} parent=1 // pred_fallthru
      _
    // Predicated region
    $region26: #{tpu_custom_call.1} parent=1 // pred_check
      _
    $region27: #{tpu_custom_call.1} parent=1 // pred_check_branch
      %66 = sbr.rel (0) target = $region29
    $region28: #{tpu_custom_call.1} parent=1 // pred_region
      %67 = dma.done [#allocation8], 2048
    $region29: #{tpu_custom_call.1} parent=1 // pred_fallthru
      _
    // Predicated region
    $region30: #{tpu_custom_call.1} parent=1 // pred_check
      _
    $region31: #{tpu_custom_call.1} parent=1 // pred_check_branch
      %69 = sbr.rel (0) target = $region33
    $region32: #{tpu_custom_call.1} parent=1 // pred_region
      %70 = dma.done [#allocation8], 2048
    $region33: #{tpu_custom_call.1} parent=1 // pred_fallthru
      _
    // Predicated region
    $region34: #{tpu_custom_call.1} parent=1 // pred_check
      _
    $region35: #{tpu_custom_call.1} parent=1 // pred_check_branch
      %72 = sbr.rel (0) target = $region37
    $region36: #{tpu_custom_call.1} parent=1 // pred_region
      %73 = dma.done [#allocation11], 2048
    $region37: #{tpu_custom_call.1} parent=1 // pred_fallthru
      _
    %p74 = scmp.eq.s32.totalorder 0, 0
    // Predicated region
    $region38: #{tpu_custom_call.1} parent=1 // pred_check
      %p75 = pneg %p74
    $region39: #{tpu_custom_call.1} parent=1 // pred_check_branch
      %77 = sbr.rel (%p75) target = $region41
    $region40: #{tpu_custom_call.1} parent=1 // pred_region
      %78 = vst [vmem:[#allocation2] sm:$0xff] 0.0
    $region41: #{tpu_custom_call.1} parent=1 // pred_fallthru
      _
    %p79 = scmp.eq.s32.totalorder 0, 0
    %p80 = pnand %p79, %p74
    %p81 = pneg %p80
    // Predicated region
    $region42: #{tpu_custom_call.1} parent=1 // pred_check
      _
    $region43: #{tpu_custom_call.1} parent=1 // pred_check_branch
      %83 = sbr.rel (%p80) target = $region45
    $region44: #{tpu_custom_call.1} parent=1 // pred_region
      %84 = vst [vmem:[#allocation3] sm:$0xff] 0.0
    $region45: #{tpu_custom_call.1} parent=1 // pred_fallthru
      _
    %v85 = vld [vmem:[#allocation4] sm:$0xff]
    %v86 = vld [vmem:[#allocation2] sm:$0xff]
    %v87 = vld [vmem:[#allocation7] sm:$0xff]
    %v88 = vld [vmem:[#allocation7 + $0x8] sm:$0xff]
    %v89 = vld [vmem:[#allocation7 + $0x10] sm:$0xff]
    %v90 = vld [vmem:[#allocation7 + $0x18] sm:$0xff]
    %v91 = vld [vmem:[#allocation7 + $0x20] sm:$0xff]
    %v92 = vld [vmem:[#allocation7 + $0x28] sm:$0xff]
    %v93 = vld [vmem:[#allocation7 + $0x30] sm:$0xff]
    %v94 = vld [vmem:[#allocation7 + $0x38] sm:$0xff]
    %v95 = vld [vmem:[#allocation7 + $0x40] sm:$0xff]
    %v96 = vld [vmem:[#allocation7 + $0x48] sm:$0xff]
    %v97 = vld [vmem:[#allocation7 + $0x50] sm:$0xff]
    %v98 = vld [vmem:[#allocation7 + $0x58] sm:$0xff]
    %v99 = vld [vmem:[#allocation7 + $0x60] sm:$0xff]
    %v100 = vld [vmem:[#allocation7 + $0x68] sm:$0xff]
    %v101 = vld [vmem:[#allocation7 + $0x70] sm:$0xff]
    %v102 = vld [vmem:[#allocation7 + $0x78] sm:$0xff]
    %103 = vmatprep.subr.mxu0 0.0
    %104 = vmatpush1.xpose.msra.mxu0 %v87
    %105 = vmatprep.subr.mxu0 0.0
    %106 = vmatpush1.xpose.msra.mxu0 %v88
    %107 = vmatprep.subr.mxu0 0.0
    %108 = vmatpush1.xpose.msra.mxu0 %v89
    %109 = vmatprep.subr.mxu0 0.0
    %110 = vmatpush1.xpose.msra.mxu0 %v90
    %111 = vmatprep.subr.mxu0 0.0
    %112 = vmatpush1.xpose.msra.mxu0 %v91
    %113 = vmatprep.subr.mxu0 0.0
    %114 = vmatpush1.xpose.msra.mxu0 %v92
    %115 = vmatprep.subr.mxu0 0.0
    %116 = vmatpush1.xpose.msra.mxu0 %v93
    %117 = vmatprep.subr.mxu0 0.0
    %118 = vmatpush1.xpose.msra.mxu0 %v94
    %119 = vmatprep.subr.mxu0 0.0
    %120 = vmatpush1.xpose.msra.mxu0 %v95
    %121 = vmatprep.subr.mxu0 0.0
    %122 = vmatpush1.xpose.msra.mxu0 %v96
    %123 = vmatprep.subr.mxu0 0.0
    %124 = vmatpush1.xpose.msra.mxu0 %v97
    %125 = vmatprep.subr.mxu0 0.0
    %126 = vmatpush1.xpose.msra.mxu0 %v98
    %127 = vmatprep.subr.mxu0 0.0
    %128 = vmatpush1.xpose.msra.mxu0 %v99
    %129 = vmatprep.subr.mxu0 0.0
    %130 = vmatpush1.xpose.msra.mxu0 %v100
    %131 = vmatprep.subr.mxu0 0.0
    %132 = vmatpush1.xpose.msra.mxu0 %v101
    %133 = vmatprep.subr.mxu0 0.0
    %134 = vmatpush1.xpose.msra.mxu0 %v102
    %135 = vmatprep.subr.mxu0 0.0
    %136 = vmatpush1.xpose.msra.mxu0 0.0
    %137 = vmatprep.subr.mxu0 0.0
    %138 = vmatpush1.xpose.msra.mxu0 0.0
    %139 = vmatprep.subr.mxu0 0.0
    %140 = vmatpush1.xpose.msra.mxu0 0.0
    %141 = vmatprep.subr.mxu0 0.0
    %142 = vmatpush1.xpose.msra.mxu0 0.0
    %143 = vmatprep.subr.mxu0 0.0
    %144 = vmatpush1.xpose.msra.mxu0 0.0
    %145 = vmatprep.subr.mxu0 0.0
    %146 = vmatpush1.xpose.msra.mxu0 0.0
    %147 = vmatprep.subr.mxu0 0.0
    %148 = vmatpush1.xpose.msra.mxu0 0.0
    %149 = vmatprep.subr.mxu0 0.0
    %150 = vmatpush1.xpose.msra.mxu0 0.0
    %151 = vmatprep.subr.mxu0 0.0
    %152 = vmatpush1.xpose.msra.mxu0 0.0
    %153 = vmatprep.subr.mxu0 0.0
    %154 = vmatpush1.xpose.msra.mxu0 0.0
    %155 = vmatprep.subr.mxu0 0.0
    %156 = vmatpush1.xpose.msra.mxu0 0.0
    %157 = vmatprep.subr.mxu0 0.0
    %158 = vmatpush1.xpose.msra.mxu0 0.0
    %159 = vmatprep.subr.mxu0 0.0
    %160 = vmatpush1.xpose.msra.mxu0 0.0
    %161 = vmatprep.subr.mxu0 0.0
    %162 = vmatpush1.xpose.msra.mxu0 0.0
    %163 = vmatprep.subr.mxu0 0.0
    %164 = vmatpush1.xpose.msra.mxu0 0.0
    %165 = vmatprep.subr.mxu0 0.0
    %166 = vmatpush1.xpose.msra.mxu0 0.0
    %167 = vmatprep.mubr.f32.mxu0 0.0
    %168 = vmatmul.mubr.f32.gmra.mrb[0].mxu0 %v85
    %v169 = vpop.f32.mrb[0].mxu0
    %v170 = vadd.f32 0.0, %v169
    %v171 = vpop.f32.mrb[0].mxu0
    %172 = vdwg.mxu0
    %v173 = vadd.f32 %v86, %v170
    %174 = vst [vmem:[#allocation2] sm:$0xff] %v173
    // Predicated region
    $region46: #{tpu_custom_call.1} parent=1 // pred_check
      %p175 = pneg %p79
    $region47: #{tpu_custom_call.1} parent=1 // pred_check_branch
      %177 = sbr.rel (%p175) target = $region49
    $region48: #{tpu_custom_call.1} parent=1 // pred_region
      %v178 = vld [vmem:[#allocation3] sm:$0xff]
      %v179 = vld [vmem:[#allocation9] sm:$0xff]
      %v180 = vld [vmem:[#allocation9 + $0x8] sm:$0xff]
      %v181 = vld [vmem:[#allocation9 + $0x10] sm:$0xff]
      %v182 = vld [vmem:[#allocation9 + $0x18] sm:$0xff]
      %v183 = vld [vmem:[#allocation9 + $0x20] sm:$0xff]
      %v184 = vld [vmem:[#allocation9 + $0x28] sm:$0xff]
      %v185 = vld [vmem:[#allocation9 + $0x30] sm:$0xff]
      %v186 = vld [vmem:[#allocation9 + $0x38] sm:$0xff]
      %v187 = vld [vmem:[#allocation9 + $0x40] sm:$0xff]
      %v188 = vld [vmem:[#allocation9 + $0x48] sm:$0xff]
      %v189 = vld [vmem:[#allocation9 + $0x50] sm:$0xff]
      %v190 = vld [vmem:[#allocation9 + $0x58] sm:$0xff]
      %v191 = vld [vmem:[#allocation9 + $0x60] sm:$0xff]
      %v192 = vld [vmem:[#allocation9 + $0x68] sm:$0xff]
      %v193 = vld [vmem:[#allocation9 + $0x70] sm:$0xff]
      %v194 = vld [vmem:[#allocation9 + $0x78] sm:$0xff]
      %195 = vmatprep.subr.mxu0 0.0
      %196 = vmatpush1.msra.mxu0 %v179
      %197 = vmatprep.subr.mxu0 0.0
      %198 = vmatpush1.msra.mxu0 %v180
      %199 = vmatprep.subr.mxu0 0.0
      %200 = vmatpush1.msra.mxu0 %v181
      %201 = vmatprep.subr.mxu0 0.0
      %202 = vmatpush1.msra.mxu0 %v182
      %203 = vmatprep.subr.mxu0 0.0
      %204 = vmatpush1.msra.mxu0 %v183
      %205 = vmatprep.subr.mxu0 0.0
      %206 = vmatpush1.msra.mxu0 %v184
      %207 = vmatprep.subr.mxu0 0.0
      %208 = vmatpush1.msra.mxu0 %v185
      %209 = vmatprep.subr.mxu0 0.0
      %210 = vmatpush1.msra.mxu0 %v186
      %211 = vmatprep.subr.mxu0 0.0
      %212 = vmatpush1.msra.mxu0 %v187
      %213 = vmatprep.subr.mxu0 0.0
      %214 = vmatpush1.msra.mxu0 %v188
      %215 = vmatprep.subr.mxu0 0.0
      %216 = vmatpush1.msra.mxu0 %v189
      %217 = vmatprep.subr.mxu0 0.0
      %218 = vmatpush1.msra.mxu0 %v190
      %219 = vmatprep.subr.mxu0 0.0
      %220 = vmatpush1.msra.mxu0 %v191
      %221 = vmatprep.subr.mxu0 0.0
      %222 = vmatpush1.msra.mxu0 %v192
      %223 = vmatprep.subr.mxu0 0.0
      %224 = vmatpush1.msra.mxu0 %v193
      %225 = vmatprep.subr.mxu0 0.0
      %226 = vmatpush1.msra.mxu0 %v194
      %227 = vmatprep.subr.mxu0 0.0
      %228 = vmatpush1.msra.mxu0 0.0
      %229 = vmatprep.subr.mxu0 0.0
      %230 = vmatpush1.msra.mxu0 0.0
      %231 = vmatprep.subr.mxu0 0.0
      %232 = vmatpush1.msra.mxu0 0.0
      %233 = vmatprep.subr.mxu0 0.0
      %234 = vmatpush1.msra.mxu0 0.0
      %235 = vmatprep.subr.mxu0 0.0
      %236 = vmatpush1.msra.mxu0 0.0
      %237 = vmatprep.subr.mxu0 0.0
      %238 = vmatpush1.msra.mxu0 0.0
      %239 = vmatprep.subr.mxu0 0.0
      %240 = vmatpush1.msra.mxu0 0.0
      %241 = vmatprep.subr.mxu0 0.0
      %242 = vmatpush1.msra.mxu0 0.0
      %243 = vmatprep.subr.mxu0 0.0
      %244 = vmatpush1.msra.mxu0 0.0
      %245 = vmatprep.subr.mxu0 0.0
      %246 = vmatpush1.msra.mxu0 0.0
      %247 = vmatprep.subr.mxu0 0.0
      %248 = vmatpush1.msra.mxu0 0.0
      %249 = vmatprep.subr.mxu0 0.0
      %250 = vmatpush1.msra.mxu0 0.0
      %251 = vmatprep.subr.mxu0 0.0
      %252 = vmatpush1.msra.mxu0 0.0
      %253 = vmatprep.subr.mxu0 0.0
      %254 = vmatpush1.msra.mxu0 0.0
      %255 = vmatprep.subr.mxu0 0.0
      %256 = vmatpush1.msra.mxu0 0.0
      %257 = vmatprep.subr.mxu0 0.0
      %258 = vmatpush1.msra.mxu0 0.0
      %259 = vmatprep.mubr.f32.mxu0 0.0
      %260 = vmatmul.mubr.f32.gmra.mrb[0].mxu0 %v85
      %v261 = vpop.f32.mrb[0].mxu0
      %v262 = vadd.f32 0.0, %v261
      %v263 = vpop.f32.mrb[0].mxu0
      %264 = vdwg.mxu0
      %v265 = vadd.f32 %v178, %v262
      %266 = vst [vmem:[#allocation3] sm:$0xff] %v265
    $region49: #{tpu_custom_call.1} parent=1 // pred_fallthru
      _
    // Predicated region
    $region50: #{tpu_custom_call.1} parent=1 // pred_check
      %p267 = pneg %p74
    $region51: #{tpu_custom_call.1} parent=1 // pred_check_branch
      %269 = sbr.rel (%p267) target = $region53
    $region52: #{tpu_custom_call.1} parent=1 // pred_region
      %v270 = vld [vmem:[#allocation3] sm:$0xff]
      %v271 = vmul.f32 %v270, 8.0
      %v272 = vld [vmem:[#allocation10] sm:$0xff]
      %v273 = vld [vmem:[#allocation10 + $0x8] sm:$0xff]
      %v274 = vld [vmem:[#allocation10 + $0x10] sm:$0xff]
      %v275 = vld [vmem:[#allocation10 + $0x18] sm:$0xff]
      %v276 = vld [vmem:[#allocation10 + $0x20] sm:$0xff]
      %v277 = vld [vmem:[#allocation10 + $0x28] sm:$0xff]
      %v278 = vld [vmem:[#allocation10 + $0x30] sm:$0xff]
      %v279 = vld [vmem:[#allocation10 + $0x38] sm:$0xff]
      %v280 = vld [vmem:[#allocation10 + $0x40] sm:$0xff]
      %v281 = vld [vmem:[#allocation10 + $0x48] sm:$0xff]
      %v282 = vld [vmem:[#allocation10 + $0x50] sm:$0xff]
      %v283 = vld [vmem:[#allocation10 + $0x58] sm:$0xff]
      %v284 = vld [vmem:[#allocation10 + $0x60] sm:$0xff]
      %v285 = vld [vmem:[#allocation10 + $0x68] sm:$0xff]
      %v286 = vld [vmem:[#allocation10 + $0x70] sm:$0xff]
      %v287 = vld [vmem:[#allocation10 + $0x78] sm:$0xff]
      %288 = vmatprep.subr.mxu0 0.0
      %289 = vmatpush1.msra.mxu0 %v272
      %290 = vmatprep.subr.mxu0 0.0
      %291 = vmatpush1.msra.mxu0 %v273
      %292 = vmatprep.subr.mxu0 0.0
      %293 = vmatpush1.msra.mxu0 %v274
      %294 = vmatprep.subr.mxu0 0.0
      %295 = vmatpush1.msra.mxu0 %v275
      %296 = vmatprep.subr.mxu0 0.0
      %297 = vmatpush1.msra.mxu0 %v276
      %298 = vmatprep.subr.mxu0 0.0
      %299 = vmatpush1.msra.mxu0 %v277
      %300 = vmatprep.subr.mxu0 0.0
      %301 = vmatpush1.msra.mxu0 %v278
      %302 = vmatprep.subr.mxu0 0.0
      %303 = vmatpush1.msra.mxu0 %v279
      %304 = vmatprep.subr.mxu0 0.0
      %305 = vmatpush1.msra.mxu0 %v280
      %306 = vmatprep.subr.mxu0 0.0
      %307 = vmatpush1.msra.mxu0 %v281
      %308 = vmatprep.subr.mxu0 0.0
      %309 = vmatpush1.msra.mxu0 %v282
      %310 = vmatprep.subr.mxu0 0.0
      %311 = vmatpush1.msra.mxu0 %v283
      %312 = vmatprep.subr.mxu0 0.0
      %313 = vmatpush1.msra.mxu0 %v284
      %314 = vmatprep.subr.mxu0 0.0
      %315 = vmatpush1.msra.mxu0 %v285
      %316 = vmatprep.subr.mxu0 0.0
      %317 = vmatpush1.msra.mxu0 %v286
      %318 = vmatprep.subr.mxu0 0.0
      %319 = vmatpush1.msra.mxu0 %v287
      %320 = vmatprep.subr.mxu0 0.0
      %321 = vmatpush1.msra.mxu0 0.0
      %322 = vmatprep.subr.mxu0 0.0
      %323 = vmatpush1.msra.mxu0 0.0
      %324 = vmatprep.subr.mxu0 0.0
      %325 = vmatpush1.msra.mxu0 0.0
      %326 = vmatprep.subr.mxu0 0.0
      %327 = vmatpush1.msra.mxu0 0.0
      %328 = vmatprep.subr.mxu0 0.0
      %329 = vmatpush1.msra.mxu0 0.0
      %330 = vmatprep.subr.mxu0 0.0
      %331 = vmatpush1.msra.mxu0 0.0
      %332 = vmatprep.subr.mxu0 0.0
      %333 = vmatpush1.msra.mxu0 0.0
      %334 = vmatprep.subr.mxu0 0.0
      %335 = vmatpush1.msra.mxu0 0.0
      %336 = vmatprep.subr.mxu0 0.0
      %337 = vmatpush1.msra.mxu0 0.0
      %338 = vmatprep.subr.mxu0 0.0
      %339 = vmatpush1.msra.mxu0 0.0
      %340 = vmatprep.subr.mxu0 0.0
      %341 = vmatpush1.msra.mxu0 0.0
      %342 = vmatprep.subr.mxu0 0.0
      %343 = vmatpush1.msra.mxu0 0.0
      %344 = vmatprep.subr.mxu0 0.0
      %345 = vmatpush1.msra.mxu0 0.0
      %346 = vmatprep.subr.mxu0 0.0
      %347 = vmatpush1.msra.mxu0 0.0
      %348 = vmatprep.subr.mxu0 0.0
      %349 = vmatpush1.msra.mxu0 0.0
      %350 = vmatprep.subr.mxu0 0.0
      %351 = vmatpush1.msra.mxu0 0.0
      %352 = vmatprep.mubr.f32.mxu0 0.0
      %353 = vmatmul.mubr.f32.gmra.mrb[0].mxu0 %v271
      %v354 = vpop.f32.mrb[0].mxu0
      %v355 = vadd.f32 0.0, %v354
      %v356 = vpop.f32.mrb[0].mxu0
      %357 = vdwg.mxu0
      %v358 = vld [vmem:[#allocation2] sm:$0xff]
      %v359 = vld [vmem:[%s2] sm:$0x1]
      %v361 = vlaneseq
      %v362 = vshrl.u32 %v361, 7
      %v363 = vsub.s32 0, %v362
      %v364 = vrot.slane %v359, %v363
      %v366 = vadd.f32 %v358, %v364
      %v367 = vadd.f32 %v366, %v355
      %368 = vst [vmem:[#allocation12] sm:$0xff] %v367
    $region53: #{tpu_custom_call.1} parent=1 // pred_fallthru
      _
    // Predicated region
    $region54: #{tpu_custom_call.1} parent=1 // pred_check
      _
    $region55: #{tpu_custom_call.1} parent=1 // pred_check_branch
      %370 = sbr.rel (0) target = $region57
    $region56: #{tpu_custom_call.1} parent=1 // pred_region
      %s372 = ssub.s32 128, 128
      %373 = vsyncadd [#allocation6], %s372
      %s375 = sshll.u32 [#allocation12], 4
      %s376 = int_to_ptr.vmem [resolvable:$true] %s375
      %378 = dma.vmem_to_hbm [thread:$0]  %s376, 128, %s5, [#allocation6]
    $region57: #{tpu_custom_call.1} parent=1 // pred_fallthru
      _
    // Predicated region
    $region58: #{tpu_custom_call.1} parent=1 // pred_check
      _
    $region59: #{tpu_custom_call.1} parent=1 // pred_check_branch
      %380 = sbr.rel (0) target = $region61
    $region60: #{tpu_custom_call.1} parent=1 // pred_region
      %381 = dma.done [#allocation6], 128
    $region61: #{tpu_custom_call.1} parent=1 // pred_fallthru
      _
    %382 = vsyncpa [#allocation5], 1
    %383 = vsyncpa [#allocation8], 1
    %384 = vsyncpa [#allocation11], 1
    %385 = vsyncpa [#allocation6], 1

</llo_original>
